<compile_context>
chip_gen: v5e
topology: v5e:2x2
jax: 0.10.0
libtpu: 0.0.40
codegen_flags: <defaults>
</compile_context>

<pallas_src>
import functools

import jax
import jax.numpy as jnp
from jax.experimental import pallas as pl
from jax.experimental.pallas import tpu as pltpu

LANE = 128
MAX_TILE_ROWS = 4096                 # v7x-safe row cap (2 MiB f32 block)
MAX_BLOCK_BYTES = 2 * 1024 * 1024    # per-input HBM bytes per grid step
FALLBACK_MAX_BYTES = 512 * 1024      # below this, fused XLA beats a kernel launch


def _cdiv(a, b):
    return (a + b - 1) // b


def _round_up(x, m):
    return ((x + m - 1) // m) * m


def _sublane_rows(dtype):
    # Native packing: (8,128) f32, (16,128) bf16/f16, (32,128) int8/fp8.
    return max(8, 32 // jnp.dtype(dtype).itemsize)


def _mse_direction_kernel(p_ref, r_ref, acc_ref, *, tile_r, rows_valid,
                          need_mask, exact_sse):
    """Accumulate lane/sublane-wise partial sums for one (sample, split).

    p_ref / r_ref : (tile_r, 128) tile (native input dtype).
    acc_ref       : (8*nq, 128) f32 resident output block used as accumulator:
                      rows  0: 8  -> sum(p*r)
                      rows  8:16  -> sum(p*p)
                      rows 16:24  -> sum(r*r)
                      rows 24:32  -> sum((p-r)^2)      (only when exact_sse)
    """
    s = pl.program_id(1)
    k = pl.program_id(2)

    @pl.when(k == 0)
    def _():
        acc_ref[...] = jnp.zeros_like(acc_ref)

    p = p_ref[...].astype(jnp.float32)
    r = r_ref[...].astype(jnp.float32)

    def _rsum(x):
        # (tile_r, 128) -> (8, 128): vreg-aligned regrouping + pure VPU adds.
        # The cross-sublane / cross-lane reduce is deferred to the JAX epilogue.
        return jnp.sum(x.reshape(tile_r // 8, 8, LANE), axis=0)

    def _accumulate(p, r):
        acc_ref[0:8, :] += _rsum(p * r)
        acc_ref[8:16, :] += _rsum(p * p)
        acc_ref[16:24, :] += _rsum(r * r)
        if exact_sse:
            d = p - r
            acc_ref[24:32, :] += _rsum(d * d)

    if need_mask:
        # Every block start is guaranteed in-bounds by the wrapper, so exactly one
        # tile (the global last one) straddles the end of the real rows; all other
        # tiles take the unmasked branch and pay no masking cost.
        is_tail = jnp.logical_and(s == pl.num_programs(1) - 1,
                                  k == pl.num_programs(2) - 1)

        @pl.when(jnp.logical_not(is_tail))
        def _():
            _accumulate(p, r)

        @pl.when(is_tail)
        def _():
            row0 = (s * pl.num_programs(2) + k) * tile_r
            rows = jax.lax.broadcasted_iota(jnp.int32, (tile_r, LANE), 0)
            valid = rows < (rows_valid - row0)
            _accumulate(jnp.where(valid, p, 0.0), jnp.where(valid, r, 0.0))
    else:
        _accumulate(p, r)


def _jax_reference(output_pred, output_real, lamda=0.5, eps=1e-8):
    """Plain fused-XLA implementation (also the small-input fast path)."""
    B = output_pred.shape[0]
    p = output_pred.reshape(B, -1).astype(jnp.float32)
    r = output_real.reshape(B, -1).astype(jnp.float32)
    mse = jnp.mean((p - r) ** 2)
    dot = jnp.sum(p * r, axis=1)
    pn = jnp.sqrt(jnp.sum(p * p, axis=1))
    rn = jnp.sqrt(jnp.sum(r * r, axis=1))
    cos = dot / (jnp.maximum(pn, eps) * jnp.maximum(rn, eps))
    return jnp.float32(lamda) * mse + jnp.mean(1.0 - cos)


def mse_direction_loss(output_pred, output_real, lamda=0.5, eps=1e-8, *,
                       exact_sse=True, use_kernel=None):
    """lamda * mean((p-r)^2) + mean_b(1 - cos_sim(p_b.flatten(), r_b.flatten()))."""
    assert output_pred.shape == output_real.shape
    assert output_pred.ndim >= 2
    B = int(output_pred.shape[0])
    D = 1
    for dim in output_pred.shape[1:]:
        D *= int(dim)

    itemsize = jnp.dtype(output_pred.dtype).itemsize
    if use_kernel is None:
        use_kernel = 2 * B * D * itemsize >= FALLBACK_MAX_BYTES
    if not use_kernel:
        # Tiny inputs: pallas_call launch + per-step overhead would dominate.
        return _jax_reference(output_pred, output_real, lamda, eps)

    sub = _sublane_rows(output_pred.dtype)
    max_rows = min(MAX_TILE_ROWS, MAX_BLOCK_BYTES // (LANE * itemsize))
    R = _cdiv(D, LANE)                          # rows per sample after lane packing

    # 2-way row split when B == 1 so both v7x TensorCores get parallel work
    # (no-op on single-TC v5e/v6e); skipped when too small to matter.
    nsplit = 2 if (B == 1 and R >= 8 * sub) else 1
    kr = max(1, _cdiv(R, nsplit * max_rows))    # reduction steps per split
    tile_r = _round_up(_cdiv(R, nsplit * kr), sub)
    if nsplit > 1 and (nsplit * kr - 1) * tile_r >= R:
        nsplit = 1                              # degenerate split: drop it
        kr = max(1, _cdiv(R, max_rows))
        tile_r = _round_up(_cdiv(R, kr), sub)
    rows_cover = nsplit * kr * tile_r           # rows touched by the grid

    # Only pad when unavoidable:
    #   * degenerate tiny shapes (block start/size would go fully OOB): pad rows,
    #   * D not a lane multiple: pad up to the next lane multiple only.
    # The common conv-feature case (D % 128 == 0) streams the unpadded view and
    # relies on the in-kernel tail-row mask -> no extra HBM read/write of the data.
    if tile_r > R or (nsplit * kr - 1) * tile_r >= R:
        rows_valid = rows_cover
    else:
        rows_valid = R

    p2 = output_pred.reshape(B, D)
    r2 = output_real.reshape(B, D)
    d_target = rows_valid * LANE
    if d_target != D:
        p2 = jnp.pad(p2, ((0, 0), (0, d_target - D)))
        r2 = jnp.pad(r2, ((0, 0), (0, d_target - D)))
    p3 = p2.reshape(B, rows_valid, LANE)
    r3 = r2.reshape(B, rows_valid, LANE)

    need_mask = rows_cover != rows_valid
    nq = 4 if exact_sse else 3
    acc_rows = 8 * nq

    kernel = functools.partial(
        _mse_direction_kernel, tile_r=tile_r, rows_valid=rows_valid,
        need_mask=need_mask, exact_sse=exact_sse)

    cost = pl.CostEstimate(
        flops=(9 if exact_sse else 6) * B * rows_cover * LANE,
        transcendentals=0,
        bytes_accessed=2 * B * rows_valid * LANE * itemsize
        + B * nsplit * acc_rows * LANE * 4,
    )

    def _row_block(b, s, k):
        return (b, s * kr + k, 0)

    # Blocks are >= ~1 MiB so the default double buffering already hides DMA;
    # pipeline_mode=pl.Buffered(3) was evaluated and not needed.
    sums = pl.pallas_call(
        kernel,
        out_shape=jax.ShapeDtypeStruct((B, nsplit, acc_rows, LANE), jnp.float32),
        grid_spec=pltpu.PrefetchScalarGridSpec(
            num_scalar_prefetch=0,
            grid=(B, nsplit, kr),               # reduction axis last
            in_specs=[
                pl.BlockSpec((None, tile_r, LANE), _row_block),
                pl.BlockSpec((None, tile_r, LANE), _row_block),
            ],
            out_specs=pl.BlockSpec((None, None, acc_rows, LANE),
                                   lambda b, s, k: (b, s, 0, 0)),
        ),
        compiler_params=pltpu.CompilerParams(
            dimension_semantics=("parallel", "parallel", "arbitrary"),
            vmem_limit_bytes=32 * 1024 * 1024,
        ),
        cost_estimate=cost,
    )(p3, r3)

    # Tiny O(B) epilogue: cross-sublane/lane reduce + cos / mse math.
    sums = sums.reshape(B, nsplit, nq, 8, LANE).sum(axis=(1, 3, 4))   # (B, nq)
    dot, pn2, rn2 = sums[:, 0], sums[:, 1], sums[:, 2]
    sse = sums[:, 3] if exact_sse else (pn2 + rn2 - 2.0 * dot)
    eps2 = jnp.float32(eps) ** 2
    # torch eps clamp: max(sqrt(x), eps) == sqrt(max(x, eps^2)) for x >= 0.
    inv_norm = jax.lax.rsqrt(jnp.maximum(pn2, eps2)) * jax.lax.rsqrt(
        jnp.maximum(rn2, eps2))
    one_minus_cos = 1.0 - dot * inv_norm
    mse = jnp.sum(sse) / jnp.float32(B * D)
    return jnp.float32(lamda) * mse + jnp.mean(one_minus_cos)


if __name__ == "__main__":
    key = jax.random.PRNGKey(0)
    k1, k2, k3, k4, k5, k6 = jax.random.split(key, 6)
    lamda = 0.5   # deterministic hyperparameter (module __init__ arg)

    # 1) Small NCHW conv-feature shape; force the kernel path (auto mode would
    #    use the fused-XLA fallback at this size).
    shape = (2, 4, 16, 16)
    pred = jax.random.normal(k1, shape, dtype=jnp.float32)
    real = jax.random.normal(k2, shape, dtype=jnp.float32)
    ref = _jax_reference(pred, real, lamda=lamda)
    got = jax.block_until_ready(
        mse_direction_loss(pred, real, lamda=lamda, use_kernel=True))
    assert jnp.allclose(got, ref, rtol=1e-5, atol=1e-5), (got, ref)

    # 1b) Reduced-VALU SSE path (sse derived in the epilogue).
    got = jax.block_until_ready(
        mse_direction_loss(pred, real, lamda=lamda, use_kernel=True,
                           exact_sse=False))
    assert jnp.allclose(got, ref, rtol=1e-4, atol=1e-4), (got, ref)

    # 1c) Auto mode: tiny input -> fused-XLA fallback.
    got = jax.block_until_ready(mse_direction_loss(pred, real, lamda=lamda))
    assert jnp.allclose(got, ref, rtol=1e-5, atol=1e-5), (got, ref)

    # 2) B == 1, D not a lane multiple: exercises the 2-way TensorCore split,
    #    the lane-multiple pad and the in-kernel tail-row mask.
    shape = (1, 8, 34, 34)
    pred = jax.random.normal(k3, shape, dtype=jnp.float32)
    real = jax.random.normal(k4, shape, dtype=jnp.float32)
    ref = _jax_reference(pred, real, lamda=lamda)
    got = jax.block_until_ready(
        mse_direction_loss(pred, real, lamda=lamda, use_kernel=True))
    assert jnp.allclose(got, ref, rtol=1e-5, atol=1e-5), (got, ref)

    # 3) Native bf16 streaming (half the HBM bytes) with f32 accumulation and
    #    dtype-aware (16,128) sublane rounding.
    shape = (2, 8, 32, 32)
    pred = jax.random.normal(k5, shape, dtype=jnp.float32).astype(jnp.bfloat16)
    real = jax.random.normal(k6, shape, dtype=jnp.float32).astype(jnp.bfloat16)
    ref = _jax_reference(pred, real, lamda=lamda)
    got = jax.block_until_ready(
        mse_direction_loss(pred, real, lamda=lamda, use_kernel=True))
    assert jnp.allclose(got, ref, rtol=1e-4, atol=1e-4), (got, ref)

    print("KERNEL_OK")
</pallas_src>

<mosaic_0001>
module attributes {stable_mosaic.version = 11 : i64} {
  func.func @_mse_direction_kernel(%arg0: i32, %arg1: i32, %arg2: i32, %arg3: memref<1x8x128xf32, #tpu.memory_space<vmem>>, %arg4: memref<1x8x128xf32, #tpu.memory_space<vmem>>, %arg5: memref<1x1x32x128xf32, #tpu.memory_space<vmem>>) attributes {dimension_semantics = [#tpu.dimension_semantics<parallel>, #tpu.dimension_semantics<parallel>, #tpu.dimension_semantics<arbitrary>], iteration_bounds = array<i64: 2, 1, 1>, scalar_prefetch = 0 : i64, scratch_operands = 0 : i64, tpu.core_type = #tpu.core_type<tc>, window_params = [{transform_indices = @transform_0, window_bounds = array<i64: 1, 8, 128>}, {transform_indices = @transform_1, window_bounds = array<i64: 1, 8, 128>}, {transform_indices = @transform_2, window_bounds = array<i64: 1, 1, 32, 128>}]} {
    %c0_i32 = arith.constant 0 : i32
    %0 = arith.cmpi eq, %arg2, %c0_i32 : i32
    %1 = arith.extui %0 : i1 to i32
    %c0_i32_0 = arith.constant 0 : i32
    %2 = arith.cmpi ne, %1, %c0_i32_0 : i32
    scf.if %2 {
      %cst_38 = arith.constant 0.000000e+00 : f32
      %44 = vector.broadcast %cst_38 : f32 to vector<32x128xf32>
      %c0_39 = arith.constant 0 : index
      %c0_40 = arith.constant 0 : index
      %c0_41 = arith.constant 0 : index
      %c0_42 = arith.constant 0 : index
      %45 = vector.load %arg5[%c0_39, %c0_40, %c0_41, %c0_42] : memref<1x1x32x128xf32, #tpu.memory_space<vmem>>, vector<1x1x32x128xf32>
      %46 = vector.shape_cast %45 : vector<1x1x32x128xf32> to vector<32x128xf32>
      %47 = vector.shape_cast %44 : vector<32x128xf32> to vector<1x1x32x128xf32>
      tpu.vector_store %arg5[%c0_39, %c0_40, %c0_41, %c0_42], %47 {strides = array<i32>} : memref<1x1x32x128xf32, #tpu.memory_space<vmem>>, vector<1x1x32x128xf32>,
    } else {
    }
    %c0 = arith.constant 0 : index
    %c0_1 = arith.constant 0 : index
    %c0_2 = arith.constant 0 : index
    %3 = vector.load %arg3[%c0, %c0_1, %c0_2] : memref<1x8x128xf32, #tpu.memory_space<vmem>>, vector<1x8x128xf32>
    %4 = vector.shape_cast %3 : vector<1x8x128xf32> to vector<8x128xf32>
    %c0_3 = arith.constant 0 : index
    %c0_4 = arith.constant 0 : index
    %c0_5 = arith.constant 0 : index
    %5 = vector.load %arg4[%c0_3, %c0_4, %c0_5] : memref<1x8x128xf32, #tpu.memory_space<vmem>>, vector<1x8x128xf32>
    %6 = vector.shape_cast %5 : vector<1x8x128xf32> to vector<8x128xf32>
    %c0_6 = arith.constant 0 : index
    %c0_7 = arith.constant 0 : index
    %c0_8 = arith.constant 0 : index
    %c0_9 = arith.constant 0 : index
    %7 = vector.load %arg5[%c0_6, %c0_7, %c0_8, %c0_9] : memref<1x1x32x128xf32, #tpu.memory_space<vmem>>, vector<1x1x8x128xf32>
    %8 = vector.shape_cast %7 : vector<1x1x8x128xf32> to vector<8x128xf32>
    %9 = arith.mulf %4, %6 : vector<8x128xf32>
    %10 = vector.shape_cast %9 : vector<8x128xf32> to vector<1x8x128xf32>
    %cst = arith.constant dense<0.000000e+00> : vector<8x128xf32>
    %11 = vector.multi_reduction <add>, %10, %cst [0] : vector<1x8x128xf32> to vector<8x128xf32>
    %12 = arith.addf %8, %11 : vector<8x128xf32>
    %c0_10 = arith.constant 0 : index
    %c0_11 = arith.constant 0 : index
    %c0_12 = arith.constant 0 : index
    %c0_13 = arith.constant 0 : index
    %13 = vector.load %arg5[%c0_10, %c0_11, %c0_12, %c0_13] : memref<1x1x32x128xf32, #tpu.memory_space<vmem>>, vector<1x1x8x128xf32>
    %14 = vector.shape_cast %13 : vector<1x1x8x128xf32> to vector<8x128xf32>
    %15 = vector.shape_cast %12 : vector<8x128xf32> to vector<1x1x8x128xf32>
    tpu.vector_store %arg5[%c0_10, %c0_11, %c0_12, %c0_13], %15 {strides = array<i32>} : memref<1x1x32x128xf32, #tpu.memory_space<vmem>>, vector<1x1x8x128xf32>,
    %c0_14 = arith.constant 0 : index
    %c0_15 = arith.constant 0 : index
    %c8 = arith.constant 8 : index
    %c0_16 = arith.constant 0 : index
    %16 = vector.load %arg5[%c0_14, %c0_15, %c8, %c0_16] : memref<1x1x32x128xf32, #tpu.memory_space<vmem>>, vector<1x1x8x128xf32>
    %17 = vector.shape_cast %16 : vector<1x1x8x128xf32> to vector<8x128xf32>
    %18 = arith.mulf %4, %4 : vector<8x128xf32>
    %19 = vector.shape_cast %18 : vector<8x128xf32> to vector<1x8x128xf32>
    %cst_17 = arith.constant dense<0.000000e+00> : vector<8x128xf32>
    %20 = vector.multi_reduction <add>, %19, %cst_17 [0] : vector<1x8x128xf32> to vector<8x128xf32>
    %21 = arith.addf %17, %20 : vector<8x128xf32>
    %c0_18 = arith.constant 0 : index
    %c0_19 = arith.constant 0 : index
    %c8_20 = arith.constant 8 : index
    %c0_21 = arith.constant 0 : index
    %22 = vector.load %arg5[%c0_18, %c0_19, %c8_20, %c0_21] : memref<1x1x32x128xf32, #tpu.memory_space<vmem>>, vector<1x1x8x128xf32>
    %23 = vector.shape_cast %22 : vector<1x1x8x128xf32> to vector<8x128xf32>
    %24 = vector.shape_cast %21 : vector<8x128xf32> to vector<1x1x8x128xf32>
    tpu.vector_store %arg5[%c0_18, %c0_19, %c8_20, %c0_21], %24 {strides = array<i32>} : memref<1x1x32x128xf32, #tpu.memory_space<vmem>>, vector<1x1x8x128xf32>,
    %c0_22 = arith.constant 0 : index
    %c0_23 = arith.constant 0 : index
    %c16 = arith.constant 16 : index
    %c0_24 = arith.constant 0 : index
    %25 = vector.load %arg5[%c0_22, %c0_23, %c16, %c0_24] : memref<1x1x32x128xf32, #tpu.memory_space<vmem>>, vector<1x1x8x128xf32>
    %26 = vector.shape_cast %25 : vector<1x1x8x128xf32> to vector<8x128xf32>
    %27 = arith.mulf %6, %6 : vector<8x128xf32>
    %28 = vector.shape_cast %27 : vector<8x128xf32> to vector<1x8x128xf32>
    %cst_25 = arith.constant dense<0.000000e+00> : vector<8x128xf32>
    %29 = vector.multi_reduction <add>, %28, %cst_25 [0] : vector<1x8x128xf32> to vector<8x128xf32>
    %30 = arith.addf %26, %29 : vector<8x128xf32>
    %c0_26 = arith.constant 0 : index
    %c0_27 = arith.constant 0 : index
    %c16_28 = arith.constant 16 : index
    %c0_29 = arith.constant 0 : index
    %31 = vector.load %arg5[%c0_26, %c0_27, %c16_28, %c0_29] : memref<1x1x32x128xf32, #tpu.memory_space<vmem>>, vector<1x1x8x128xf32>
    %32 = vector.shape_cast %31 : vector<1x1x8x128xf32> to vector<8x128xf32>
    %33 = vector.shape_cast %30 : vector<8x128xf32> to vector<1x1x8x128xf32>
    tpu.vector_store %arg5[%c0_26, %c0_27, %c16_28, %c0_29], %33 {strides = array<i32>} : memref<1x1x32x128xf32, #tpu.memory_space<vmem>>, vector<1x1x8x128xf32>,
    %34 = arith.subf %4, %6 : vector<8x128xf32>
    %c0_30 = arith.constant 0 : index
    %c0_31 = arith.constant 0 : index
    %c24 = arith.constant 24 : index
    %c0_32 = arith.constant 0 : index
    %35 = vector.load %arg5[%c0_30, %c0_31, %c24, %c0_32] : memref<1x1x32x128xf32, #tpu.memory_space<vmem>>, vector<1x1x8x128xf32>
    %36 = vector.shape_cast %35 : vector<1x1x8x128xf32> to vector<8x128xf32>
    %37 = arith.mulf %34, %34 : vector<8x128xf32>
    %38 = vector.shape_cast %37 : vector<8x128xf32> to vector<1x8x128xf32>
    %cst_33 = arith.constant dense<0.000000e+00> : vector<8x128xf32>
    %39 = vector.multi_reduction <add>, %38, %cst_33 [0] : vector<1x8x128xf32> to vector<8x128xf32>
    %40 = arith.addf %36, %39 : vector<8x128xf32>
    %c0_34 = arith.constant 0 : index
    %c0_35 = arith.constant 0 : index
    %c24_36 = arith.constant 24 : index
    %c0_37 = arith.constant 0 : index
    %41 = vector.load %arg5[%c0_34, %c0_35, %c24_36, %c0_37] : memref<1x1x32x128xf32, #tpu.memory_space<vmem>>, vector<1x1x8x128xf32>
    %42 = vector.shape_cast %41 : vector<1x1x8x128xf32> to vector<8x128xf32>
    %43 = vector.shape_cast %40 : vector<8x128xf32> to vector<1x1x8x128xf32>
    tpu.vector_store %arg5[%c0_34, %c0_35, %c24_36, %c0_37], %43 {strides = array<i32>} : memref<1x1x32x128xf32, #tpu.memory_space<vmem>>, vector<1x1x8x128xf32>,
    return
  }
  func.func @transform_0(%arg0: i32, %arg1: i32, %arg2: i32) -> (i32, i32, i32) {
    %c1_i32 = arith.constant 1 : i32
    %0 = arith.muli %arg1, %c1_i32 : i32
    %1 = arith.addi %0, %arg2 : i32
    %c0_i32 = arith.constant 0 : i32
    %c0_i32_0 = arith.constant 0 : i32
    return %arg0, %1, %c0_i32 : i32, i32, i32
  }
  func.func @transform_1(%arg0: i32, %arg1: i32, %arg2: i32) -> (i32, i32, i32) {
    %c1_i32 = arith.constant 1 : i32
    %0 = arith.muli %arg1, %c1_i32 : i32
    %1 = arith.addi %0, %arg2 : i32
    %c0_i32 = arith.constant 0 : i32
    %c0_i32_0 = arith.constant 0 : i32
    return %arg0, %1, %c0_i32 : i32, i32, i32
  }
  func.func @transform_2(%arg0: i32, %arg1: i32, %arg2: i32) -> (i32, i32, i32, i32) {
    %c0_i32 = arith.constant 0 : i32
    %c0_i32_0 = arith.constant 0 : i32
    %c0_i32_1 = arith.constant 0 : i32
    return %arg0, %arg1, %c0_i32, %c0_i32_0 : i32, i32, i32, i32
  }
}

</mosaic_0001>

<llo_original>
// kernel: tpu_custom_call.1
$region0: #{tpu_custom_call.1}
  #allocation0 [shape = 'u32[]', space=smem, size = 0x4, offset = 0x4, fixed_abs, tag = 'smem constant byte address 0x4 - core index']
  #allocation1 [shape = 'u32[72,128]{1,0:T(1,128)}', space=vmem, size = 0x9000, scoped, tag = 'internal scratch']
  %s0 = inlined_call_operand.hbm [shape: f32[2,8,128], index: 0, kind: input, shape index: {}]
  %s1 = inlined_call_operand.hbm [shape: f32[2,8,128], index: 1, kind: input, shape index: {}]
  %s2 = inlined_call_operand.hbm [shape: f32[2,1,32,128], index: 2, kind: output, shape index: {}]
  %s3 = sld [smem:[#allocation0]]
  $region53: #{tpu_custom_call.1} parent=0
    _
  %s5 = ssub.s32 1, %s3
  %s6 = scalar_select 0, %s5, %s3
  $region1: #{tpu_custom_call.1} parent=0
    #allocation2 [shape = 'u8[8192]{0}', space=vmem, size = 0x2000, scoped, tag = 'input window, operand 0']
    #allocation3 [shape = 's32[2]{0}', space=sflag, size = 0x8, scoped, tag = 'scoped memory for tpu_custom_call.1']
    #allocation4 [shape = 's32[2]{0}', space=sflag, size = 0x8, scoped, tag = 'scoped memory for tpu_custom_call.1']
    #allocation5 [shape = 'u8[8192]{0}', space=vmem, size = 0x2000, scoped, tag = 'input window, operand 1']
    #allocation6 [shape = 's32[2]{0}', space=sflag, size = 0x8, scoped, tag = 'scoped memory for tpu_custom_call.1']
    #allocation7 [shape = 'u8[32768]{0}', space=vmem, size = 0x8000, scoped, tag = 'output window, operand 0']
    %7 = vsyncpa [#allocation3], 0
    %s8 = scalar_lea.sflag [#allocation3], 1
    %9 = vsyncpa %s8, 0
    %10 = vsyncpa [#allocation6], 0
    %s11 = scalar_lea.sflag [#allocation6], 1
    %12 = vsyncpa %s11, 0
    %13 = vsyncpa [#allocation4], 0
    %s14 = scalar_lea.sflag [#allocation4], 1
    %15 = vsyncpa %s14, 0
    loop: start=0, step=1, limit=4
    $region2: #{tpu_custom_call.1} parent=1 // loop_pre_header
      _
    $region3: #{tpu_custom_call.1} parent=1 // loop_header
      %s17 = sphi 0, %s21
      %p18 = scmp.ge.s32.totalorder %s17, 4
      %s24 = sphi 0, %s43
      %s25 = sphi 0, %s39
      %s26 = sphi 0, %s35
      %s27 = sphi 0, %s24
      %s28 = sphi 0, %s25
      %s29 = sphi 0, %s26
      %s30 = sphi 0, %s27
      %s31 = sphi 0, %s28
      %s32 = sphi 0, %s29
      %s50 = sphi 0, %s52
      %s53 = sphi 0, %s50
      %s54 = sphi 0, %s53
      %s70 = sphi 0, %s54
      %s80 = sphi 0, %s82
      %s83 = sphi 0, %s80
      %s84 = sphi 0, %s83
      %s100 = sphi 0, %s84
      %s108 = sphi 0, %s110
      %s111 = sphi 0, %s108
      %s112 = sphi 0, %s111
      %s128 = sphi 0, %s112
    $region4: #{tpu_custom_call.1} parent=1 // loop_header_branch
      %20 = sbr.rel (%p18) target = $region8
    $region5: #{tpu_custom_call.1} parent=1 // loop_body
      %s22 = ssub.s32 %s17, 1
      %s23 = ssub.s32 %s17, 2
      %s33 = sadd.s32 1, %s26
      %p34 = scmp.ge.s32.totalorder %s33, 1
      %s35 = scalar_select %p34, 0, %s33
      %s36 = sadd.s32 1, %s25
      %s37 = scalar_select %p34, %s36, %s25
      %p38 = scmp.ge.s32.totalorder %s37, 1
      %s39 = scalar_select %p38, 0, %s37
      %s40 = sadd.s32 1, %s24
      %s41 = scalar_select %p38, %s40, %s24
      %p42 = scmp.ge.s32.totalorder %s41, 2
      %s43 = scalar_select %p42, 0, %s41
      %s44 = sadd.s32 %s25, %s26
      %s45 = sadd.s32 %s39, %s35
      %s46 = ssub.s32 %s24, %s43
      %s47 = ssub.s32 %s44, %s45
      %s48 = sor.u32 %s46, %s47
      %p49 = scmp.eq.s32.totalorder %s48, 0
      %s51 = sadd.s32 %s50, 1
      %s52 = scalar_select %p49, %s50, %s51
      %p55 = pneg %p49
      %p56 = scmp.eq.s32.totalorder %s17, 1
      %p57 = por %p55, %p56
      %p58 = scmp.ne.s32.totalorder %s50, %s53
      %p59 = scmp.eq.s32.totalorder %s17, 0
      %p60 = por %p58, %p59
      %p61 = scmp.ne.s32.totalorder %s50, %s53
      %p62 = scmp.eq.s32.totalorder %s22, 1
      %p63 = por %p61, %p62
      %p64 = scmp.ne.s32.totalorder %s53, %s54
      %p65 = scmp.eq.s32.totalorder %s22, 0
      %p66 = por %p64, %p65
      %p67 = scmp.ne.s32.totalorder %s53, %s54
      %p68 = scmp.eq.s32.totalorder %s23, 1
      %p69 = por %p67, %p68
      %p71 = scmp.ne.s32.totalorder %s54, %s70
      %p72 = scmp.eq.s32.totalorder %s23, 0
      %p73 = por %p71, %p72
      %s74 = sadd.s32 %s25, %s26
      %s75 = sadd.s32 %s39, %s35
      %s76 = ssub.s32 %s24, %s43
      %s77 = ssub.s32 %s74, %s75
      %s78 = sor.u32 %s76, %s77
      %p79 = scmp.eq.s32.totalorder %s78, 0
      %s81 = sadd.s32 %s80, 1
      %s82 = scalar_select %p79, %s80, %s81
      %p85 = pneg %p79
      %p86 = scmp.eq.s32.totalorder %s17, 1
      %p87 = por %p85, %p86
      %p88 = scmp.ne.s32.totalorder %s80, %s83
      %p89 = scmp.eq.s32.totalorder %s17, 0
      %p90 = por %p88, %p89
      %p91 = scmp.ne.s32.totalorder %s80, %s83
      %p92 = scmp.eq.s32.totalorder %s22, 1
      %p93 = por %p91, %p92
      %p94 = scmp.ne.s32.totalorder %s83, %s84
      %p95 = scmp.eq.s32.totalorder %s22, 0
      %p96 = por %p94, %p95
      %p97 = scmp.ne.s32.totalorder %s83, %s84
      %p98 = scmp.eq.s32.totalorder %s23, 1
      %p99 = por %p97, %p98
      %p101 = scmp.ne.s32.totalorder %s84, %s100
      %p102 = scmp.eq.s32.totalorder %s23, 0
      %p103 = por %p101, %p102
      %s104 = ssub.s32 %s24, %s43
      %s105 = ssub.s32 %s25, %s39
      %s106 = sor.u32 %s104, %s105
      %p107 = scmp.eq.s32.totalorder %s106, 0
      %s109 = sadd.s32 %s108, 1
      %s110 = scalar_select %p107, %s108, %s109
      %p113 = pneg %p107
      %p114 = scmp.eq.s32.totalorder %s17, 1
      %p115 = por %p113, %p114
      %p116 = scmp.ne.s32.totalorder %s108, %s111
      %p117 = scmp.eq.s32.totalorder %s17, 0
      %p118 = por %p116, %p117
      %p119 = scmp.ne.s32.totalorder %s108, %s111
      %p120 = scmp.eq.s32.totalorder %s22, 1
      %p121 = por %p119, %p120
      %p122 = scmp.ne.s32.totalorder %s111, %s112
      %p123 = scmp.eq.s32.totalorder %s22, 0
      %p124 = por %p122, %p123
      %p125 = scmp.ne.s32.totalorder %s111, %s112
      %p126 = scmp.eq.s32.totalorder %s23, 1
      %p127 = por %p125, %p126
      %p129 = scmp.ne.s32.totalorder %s112, %s128
      %p130 = scmp.eq.s32.totalorder %s23, 0
      %p131 = por %p129, %p130
      %p132 = scmp.le.s32.totalorder 1, %s17
      %p133 = scmp.lt.s32.totalorder %s17, 3
      %p134 = pnand %p132, %p133
      %p135 = pneg %p134
      // Predicated region
      $region9: #{tpu_custom_call.1} parent=5 // pred_check
        _
      $region10: #{tpu_custom_call.1} parent=5 // pred_check_branch
        %137 = sbr.rel (%p134) target = $region12
      $region11: #{tpu_custom_call.1} parent=5 // pred_region
        %s138 = ssub.s32 %s17, 1
      $region12: #{tpu_custom_call.1} parent=5 // pred_fallthru
        _
      %p139 = scmp.lt.s32.totalorder %s17, 2
      // Predicated region
      $region13: #{tpu_custom_call.1} parent=5 // pred_check
        %p140 = pneg %p139
      $region14: #{tpu_custom_call.1} parent=5 // pred_check_branch
        %142 = sbr.rel (%p140) target = $region16
      $region15: #{tpu_custom_call.1} parent=5 // pred_region
        // Predicated region
        $region17: #{tpu_custom_call.1} parent=15 // pred_check
          %p143 = pneg %p60
        $region18: #{tpu_custom_call.1} parent=15 // pred_check_branch
          %145 = sbr.rel (%p143) target = $region20
        $region19: #{tpu_custom_call.1} parent=15 // pred_region
          %s146 = sand.u32 %s50, 1
          %s147 = scalar_lea.sflag [#allocation3], %s146
          %s148 = sand.u32 %s50, 1
          %s149 = smul.addr %s148, 8
          %s150 = scalar_lea.vmem [#allocation2], %s149
          %s151 = sadd.s32 %s25, %s26
          %153 = vsyncadd %s147, 0
          %s154 = sadd.s32 %s151, %s24
          %s155 = smul.addr %s154, 8
          %s156 = scalar_lea.hbm %s0, %s155
          %s158 = sshll.u32 %s156, 4
          %s159 = int_to_ptr.hbm [resolvable:$true] %s158
          %s160 = sshll.u32 %s150, 4
          %s161 = int_to_ptr.vmem [resolvable:$true] %s160
          %163 = dma.hbm_to_vmem [thread:$0]  %s159, 128, %s161, %s147
        $region20: #{tpu_custom_call.1} parent=15 // pred_fallthru
          _
        // Predicated region
        $region21: #{tpu_custom_call.1} parent=15 // pred_check
          %p164 = pneg %p90
        $region22: #{tpu_custom_call.1} parent=15 // pred_check_branch
          %166 = sbr.rel (%p164) target = $region24
        $region23: #{tpu_custom_call.1} parent=15 // pred_region
          %s167 = sand.u32 %s80, 1
          %s168 = scalar_lea.sflag [#allocation6], %s167
          %s169 = sand.u32 %s80, 1
          %s170 = smul.addr %s169, 8
          %s171 = scalar_lea.vmem [#allocation5], %s170
          %s172 = sadd.s32 %s25, %s26
          %174 = vsyncadd %s168, 0
          %s175 = sadd.s32 %s172, %s24
          %s176 = smul.addr %s175, 8
          %s177 = scalar_lea.hbm %s1, %s176
          %s179 = sshll.u32 %s177, 4
          %s180 = int_to_ptr.hbm [resolvable:$true] %s179
          %s181 = sshll.u32 %s171, 4
          %s182 = int_to_ptr.vmem [resolvable:$true] %s181
          %184 = dma.hbm_to_vmem [thread:$0]  %s180, 128, %s182, %s168
        $region24: #{tpu_custom_call.1} parent=15 // pred_fallthru
          _
      $region16: #{tpu_custom_call.1} parent=5 // pred_fallthru
        _
      %p185 = scmp.le.s32.totalorder 1, %s17
      %p186 = scmp.lt.s32.totalorder %s17, 3
      %p187 = pnand %p185, %p186
      %p188 = pneg %p187
      // Predicated region
      $region25: #{tpu_custom_call.1} parent=5 // pred_check
        _
      $region26: #{tpu_custom_call.1} parent=5 // pred_check_branch
        %190 = sbr.rel (%p187) target = $region28
      $region27: #{tpu_custom_call.1} parent=5 // pred_region
        %s191 = ssub.s32 %s17, 1
        %s192 = sand.u32 %s53, 1
        %s193 = scalar_lea.sflag [#allocation3], %s192
        %s194 = sand.u32 %s53, 1
        %s195 = smul.addr %s194, 8
        %s196 = scalar_lea.vmem [#allocation2], %s195
        // Predicated region
        $region29: #{tpu_custom_call.1} parent=27 // pred_check
          %p197 = pneg %p66
        $region30: #{tpu_custom_call.1} parent=27 // pred_check_branch
          %199 = sbr.rel (%p197) target = $region32
        $region31: #{tpu_custom_call.1} parent=27 // pred_region
          %201 = dma.done %s193, 128
        $region32: #{tpu_custom_call.1} parent=27 // pred_fallthru
          _
        %s202 = sand.u32 %s83, 1
        %s203 = scalar_lea.sflag [#allocation6], %s202
        %s204 = sand.u32 %s83, 1
        %s205 = smul.addr %s204, 8
        %s206 = scalar_lea.vmem [#allocation5], %s205
        // Predicated region
        $region33: #{tpu_custom_call.1} parent=27 // pred_check
          %p207 = pneg %p96
        $region34: #{tpu_custom_call.1} parent=27 // pred_check_branch
          %209 = sbr.rel (%p207) target = $region36
        $region35: #{tpu_custom_call.1} parent=27 // pred_region
          %211 = dma.done %s203, 128
        $region36: #{tpu_custom_call.1} parent=27 // pred_fallthru
          _
        %s212 = sand.u32 %s53, 1
        %s213 = scalar_lea.sflag [#allocation3], %s212
        %s214 = sand.u32 %s53, 1
        %s215 = smul.addr %s214, 8
        %s216 = scalar_lea.vmem [#allocation2], %s215
        %p217 = pneg %p66
        %p218 = pneg %p63
        %s219 = sand.u32 %s83, 1
        %s220 = scalar_lea.sflag [#allocation6], %s219
        %s221 = sand.u32 %s83, 1
        %s222 = smul.addr %s221, 8
        %s223 = scalar_lea.vmem [#allocation5], %s222
        %p224 = pneg %p96
        %p225 = pneg %p93
        %p226 = pneg %p124
        %p227 = pneg %p121
        %s228 = sand.u32 %s111, 1
        %s229 = scalar_lea.sflag [#allocation4], %s228
        %s230 = sand.u32 %s111, 1
        %s231 = smul.addr %s230, 32
        %s232 = scalar_lea.vmem [#allocation7], %s231
        %s233 = sadd.s32 %s28, %s29
        %s234 = sadd.s32 %s28, %s29
        %p235 = scmp.eq.s32.totalorder %s29, 0
        // Predicated region
        $region37: #{tpu_custom_call.1} parent=27 // pred_check
          %p236 = pneg %p235
        $region38: #{tpu_custom_call.1} parent=27 // pred_check_branch
          %238 = sbr.rel (%p236) target = $region40
        $region39: #{tpu_custom_call.1} parent=27 // pred_region
          %239 = vst [vmem:[%s232] sm:$0xff] 0.0
          %240 = vst [vmem:[%s232 + $0x8] sm:$0xff] 0.0
          %241 = vst [vmem:[%s232 + $0x10] sm:$0xff] 0.0
          %242 = vst [vmem:[%s232 + $0x18] sm:$0xff] 0.0
        $region40: #{tpu_custom_call.1} parent=27 // pred_fallthru
          _
        %v243 = vld [vmem:[%s196] sm:$0xff]
        %v244 = vld [vmem:[%s206] sm:$0xff]
        %v245 = vld [vmem:[%s232] sm:$0xff]
        %v246 = vmul.f32 %v243, %v244
        %v247 = vadd.f32 %v246, 0.0
        %v248 = vadd.f32 %v245, %v247
        %249 = vst [vmem:[%s232] sm:$0xff] %v248
        %v250 = vld [vmem:[%s232 + $0x8] sm:$0xff]
        %v251 = vmul.f32 %v243, %v243
        %v252 = vadd.f32 %v251, 0.0
        %v253 = vadd.f32 %v250, %v252
        %254 = vst [vmem:[%s232 + $0x8] sm:$0xff] %v253
        %v255 = vld [vmem:[%s232 + $0x10] sm:$0xff]
        %v256 = vmul.f32 %v244, %v244
        %v257 = vadd.f32 %v256, 0.0
        %v258 = vadd.f32 %v255, %v257
        %259 = vst [vmem:[%s232 + $0x10] sm:$0xff] %v258
        %v260 = vsub.f32 %v243, %v244
        %v261 = vld [vmem:[%s232 + $0x18] sm:$0xff]
        %v262 = vmul.f32 %v260, %v260
        %v263 = vadd.f32 %v262, 0.0
        %v264 = vadd.f32 %v261, %v263
        %265 = vst [vmem:[%s232 + $0x18] sm:$0xff] %v264
        %s266 = sand.u32 %s111, 1
        %s267 = scalar_lea.sflag [#allocation4], %s266
        %s268 = sand.u32 %s111, 1
        %s269 = smul.addr %s268, 32
        %s270 = scalar_lea.vmem [#allocation7], %s269
        // Predicated region
        $region41: #{tpu_custom_call.1} parent=27 // pred_check
          %p271 = pneg %p121
        $region42: #{tpu_custom_call.1} parent=27 // pred_check_branch
          %273 = sbr.rel (%p271) target = $region44
        $region43: #{tpu_custom_call.1} parent=27 // pred_region
          %275 = vsyncadd %s267, 0
          %s276 = smul.addr %s28, 4
          %s277 = smul.addr %s27, 4
          %s278 = sadd.s32 %s276, %s277
          %s279 = smul.addr %s278, 8
          %s280 = scalar_lea.hbm %s2, %s279
          %s281 = sshll.u32 %s270, 4
          %s282 = int_to_ptr.vmem [resolvable:$true] %s281
          %s283 = sshll.u32 %s280, 4
          %s284 = int_to_ptr.hbm [resolvable:$true] %s283
          %289 = dma.vmem_to_hbm [thread:$0]  %s282, 512, %s284, %s267, 128, 128, 8
        $region44: #{tpu_custom_call.1} parent=27 // pred_fallthru
          _
      $region28: #{tpu_custom_call.1} parent=5 // pred_fallthru
        _
      %p290 = scmp.le.s32.totalorder 2, %s17
      // Predicated region
      $region45: #{tpu_custom_call.1} parent=5 // pred_check
        %p291 = pneg %p290
      $region46: #{tpu_custom_call.1} parent=5 // pred_check_branch
        %293 = sbr.rel (%p291) target = $region48
      $region47: #{tpu_custom_call.1} parent=5 // pred_region
        %s294 = ssub.s32 %s17, 2
        // Predicated region
        $region49: #{tpu_custom_call.1} parent=47 // pred_check
          %p295 = pneg %p127
        $region50: #{tpu_custom_call.1} parent=47 // pred_check_branch
          %297 = sbr.rel (%p295) target = $region52
        $region51: #{tpu_custom_call.1} parent=47 // pred_region
          %s298 = sand.u32 %s112, 1
          %s299 = scalar_lea.sflag [#allocation4], %s298
          %s300 = sand.u32 %s112, 1
          %s301 = smul.addr %s300, 32
          %s302 = scalar_lea.vmem [#allocation7], %s301
          %304 = dma.done %s299, 512
        $region52: #{tpu_custom_call.1} parent=47 // pred_fallthru
          _
      $region48: #{tpu_custom_call.1} parent=5 // pred_fallthru
        _
    $region6: #{tpu_custom_call.1} parent=1 // loop_footer
      %s21 = sadd.s32 1, %s17
    $region7: #{tpu_custom_call.1} parent=1 // loop_footer_branch
      %16 = sbr.rel target = $region3
    $region8: #{tpu_custom_call.1} parent=1 // loop_exit
      _
    %305 = vsyncpa [#allocation3], 1
    %s306 = scalar_lea.sflag [#allocation3], 1
    %307 = vsyncpa %s306, 1
    %308 = vsyncpa [#allocation6], 1
    %s309 = scalar_lea.sflag [#allocation6], 1
    %310 = vsyncpa %s309, 1
    %311 = vsyncpa [#allocation4], 1
    %s312 = scalar_lea.sflag [#allocation4], 1
    %313 = vsyncpa %s312, 1

</llo_original>
